<compile_context>
chip_gen: v7x
topology: tpu7x:2x2x1
jax: 0.10.0
libtpu: 0.0.40
codegen_flags: <defaults>
</compile_context>

<pallas_src>
import functools

import jax
import jax.numpy as jnp
from jax import lax
from jax.experimental import pallas as pl
from jax.experimental.pallas import tpu as pltpu

# Tap order (ky, kx) row-major; must match the weight-matrix column order.
_TAP_OFFSETS = [(dy, dx) for dy in (-1, 0, 1) for dx in (-1, 0, 1)]


# ----------------------------------------------------------------------------
# Kernel: one batch group (NB images), full residual block
# ----------------------------------------------------------------------------
def _fused_resblock_kernel(x_ref, m_ref, w0_ref, b0_ref, w1_ref, b1_ref,
                           o_ref, patches_ref, *, W, CP, L):
    """out = x + conv1(relu(conv0(relu(x)))) for NB images packed on lanes.

    x_ref/o_ref : (CP, L)      L = NB*H*W; images concatenated along the lane axis
    m_ref       : (8, L)       f32 {0,1} 'same'-padding masks for off-center taps
    w*_ref      : (CP, 9*CP)   im2col weight matrix, column order (ky, kx, cin)
    b*_ref      : (CP, 1)
    patches_ref : (9*CP, L)    VMEM im2col scratch (reused by both convs)
    """
    x = x_ref[...]                                            # (CP, L) f32

    def conv3x3(h, w, b):
        # im2col: 9 shifted+masked copies of h stacked to (9*CP, L), then one
        # MXU matmul with contraction depth K = 9*CP.
        mi = 0
        for t, (dy, dx) in enumerate(_TAP_OFFSETS):
            d = dy * W + dx
            if d == 0:
                r = h
            else:
                # Roll wraps across row/image boundaries; those taps are the
                # exact positions the precomputed mask zeroes out.
                r = pltpu.roll(h, shift=(-d) % L, axis=1) * m_ref[mi:mi + 1, :]
                mi += 1
            patches_ref[t * CP:(t + 1) * CP, :] = r           # aligned full-tile vst
        return jnp.dot(w, patches_ref[...],
                       preferred_element_type=jnp.float32) + b

    h = conv3x3(jnp.maximum(x, 0.0), w0_ref[...], b0_ref[...])   # conv0(relu(x))
    h = conv3x3(jnp.maximum(h, 0.0), w1_ref[...], b1_ref[...])   # conv1(relu(.))
    o_ref[...] = (h + x).astype(o_ref.dtype)                     # + residual


# ----------------------------------------------------------------------------
# Wrapper
# ----------------------------------------------------------------------------
def residual_block(x_nchw, w0_oihw, b0, w1_oihw, b1, *, lane_target=2048):
    """ResidualBlock.forward. Input/output NCHW (PyTorch layout)."""
    N, C, H, W = x_nchw.shape
    HW = H * W
    CP = max(8, ((C + 7) // 8) * 8)          # pad channels to a sublane multiple
    f32 = jnp.float32

    # How many images share one grid step (lane packing). Largest divisor of N
    # keeping the flat lane width <= lane_target (falls back to 1 if HW is big).
    NB = 1
    for nb in range(1, N + 1):
        if N % nb == 0 and nb * HW <= lane_target:
            NB = nb
    G = N // NB
    L = NB * HW

    # Activations: NCHW -> zero-pad channels -> (CP, N*HW), lane-dense.
    xp = jnp.pad(x_nchw.astype(f32), ((0, 0), (0, CP - C), (0, 0), (0, 0)))
    xt = jnp.transpose(xp.reshape(N, CP, HW), (1, 0, 2)).reshape(CP, N * HW)

    # Weights: PyTorch OIHW -> (Cout, kH, kW, Cin) -> zero-pad -> (CP, 9*CP).
    def pack_w(w):
        w = jnp.transpose(w.astype(f32), (0, 2, 3, 1))
        w = jnp.pad(w, ((0, CP - C), (0, 0), (0, 0), (0, CP - C)))
        return w.reshape(CP, 9 * CP)

    w0m, w1m = pack_w(w0_oihw), pack_w(w1_oihw)
    b0c = jnp.pad(b0.astype(f32), (0, CP - C)).reshape(CP, 1)
    b1c = jnp.pad(b1.astype(f32), (0, CP - C)).reshape(CP, 1)

    # Boundary masks for the 8 off-center taps, hoisted out of the kernel.
    col = jnp.arange(HW, dtype=jnp.int32) % W
    row = jnp.arange(HW, dtype=jnp.int32) // W
    rows = []
    for dy, dx in _TAP_OFFSETS:
        if dy == 0 and dx == 0:
            continue
        m = jnp.ones((HW,), f32)
        if dy == -1:
            m = m * (row >= 1)
        if dy == 1:
            m = m * (row <= H - 2)
        if dx == -1:
            m = m * (col >= 1)
        if dx == 1:
            m = m * (col <= W - 2)
        rows.append(m)
    masks = jnp.tile(jnp.stack(rows), (1, NB))                    # (8, L)

    kernel = functools.partial(_fused_resblock_kernel, W=W, CP=CP, L=L)
    flops = N * 2 * (2 * HW * CP * (9 * CP))                      # two convs
    bytes_accessed = 4 * (2 * N * CP * HW + 2 * 9 * CP * CP + 2 * CP + 8 * L)

    # TODO(synk): for production spatial sizes, add a row-strip grid axis with
    # halo rows (dy taps become static sublane slices, only dx rolls remain)
    # and size the strip from per-generation VMEM (v7x: 64 MiB physical,
    # 32 MiB default scoped) via vmem_limit_bytes, keeping >=2 parallel steps
    # per TensorCore for v7x's 2 TCs.
    # TODO(synk): for production channel counts (C >= ~64), replace the im2col
    # scratch with 9 accumulated K=C dots; cast to bf16 if the model is bf16.
    out = pl.pallas_call(
        kernel,
        out_shape=jax.ShapeDtypeStruct((CP, N * HW), f32),
        grid=(G,),
        in_specs=[
            pl.BlockSpec((CP, L), lambda g: (0, g)),       # x group (lane slab)
            pl.BlockSpec((8, L), lambda g: (0, 0)),        # masks (resident)
            pl.BlockSpec((CP, 9 * CP), lambda g: (0, 0)),  # w0 (resident)
            pl.BlockSpec((CP, 1), lambda g: (0, 0)),       # b0
            pl.BlockSpec((CP, 9 * CP), lambda g: (0, 0)),  # w1
            pl.BlockSpec((CP, 1), lambda g: (0, 0)),       # b1
        ],
        out_specs=pl.BlockSpec((CP, L), lambda g: (0, g)),
        scratch_shapes=[pltpu.VMEM((9 * CP, L), f32)],
        compiler_params=pltpu.CompilerParams(
            dimension_semantics=("parallel",)),
        cost_estimate=pl.CostEstimate(flops=flops, transcendentals=0,
                                      bytes_accessed=bytes_accessed),
    )(xt, masks, w0m, b0c, w1m, b1c)

    out = out.reshape(CP, N, HW).transpose(1, 0, 2)[:, :C, :]
    return out.reshape(N, C, H, W).astype(x_nchw.dtype)


# ----------------------------------------------------------------------------
# Reference (plain JAX) for correctness check
# ----------------------------------------------------------------------------
def _ref_residual_block(x, w0, b0, w1, b1):
    def conv(inp, w, b):
        y = lax.conv_general_dilated(
            inp, w, window_strides=(1, 1), padding="SAME",
            dimension_numbers=("NCHW", "OIHW", "NCHW"))
        return y + b.reshape(1, -1, 1, 1)

    h = jax.nn.relu(x)
    h = conv(h, w0, b0)
    h = jax.nn.relu(h)
    h = conv(h, w1, b1)
    return h + x


# ----------------------------------------------------------------------------
# Main
# ----------------------------------------------------------------------------
if __name__ == "__main__":
    key = jax.random.PRNGKey(0)
    k_x, k_w0, k_b0, k_w1, k_b1 = jax.random.split(key, 5)

    N, C, H, W = 2, 4, 16, 16
    x = jax.random.normal(k_x, (N, C, H, W), dtype=jnp.float32)

    # PyTorch Conv2d shapes: OIHW weights, (C,) bias.
    w0 = 0.1 * jax.random.normal(k_w0, (C, C, 3, 3), dtype=jnp.float32)
    b0 = 0.1 * jax.random.normal(k_b0, (C,), dtype=jnp.float32)
    w1 = 0.1 * jax.random.normal(k_w1, (C, C, 3, 3), dtype=jnp.float32)
    b1 = 0.1 * jax.random.normal(k_b1, (C,), dtype=jnp.float32)

    out = jax.block_until_ready(residual_block(x, w0, b0, w1, b1))

    ref = _ref_residual_block(x, w0, b0, w1, b1)
    assert out.shape == ref.shape == (N, C, H, W)
    assert jnp.allclose(out, ref, atol=1e-4, rtol=1e-4), "mismatch vs reference"

    print("KERNEL_OK")
</pallas_src>

<mosaic_0001>
module attributes {stable_mosaic.version = 11 : i64} {
  func.func @_fused_resblock_kernel(%arg0: i32, %arg1: memref<8x512xf32, #tpu.memory_space<vmem>>, %arg2: memref<8x512xf32, #tpu.memory_space<vmem>>, %arg3: memref<8x72xf32, #tpu.memory_space<vmem>>, %arg4: memref<8x1xf32, #tpu.memory_space<vmem>>, %arg5: memref<8x72xf32, #tpu.memory_space<vmem>>, %arg6: memref<8x1xf32, #tpu.memory_space<vmem>>, %arg7: memref<8x512xf32, #tpu.memory_space<vmem>>, %arg8: memref<72x512xf32, #tpu.memory_space<vmem>>) attributes {dimension_semantics = [#tpu.dimension_semantics<parallel>], iteration_bounds = array<i64: 1>, scalar_prefetch = 0 : i64, scratch_operands = 1 : i64, tpu.core_type = #tpu.core_type<tc>, window_params = [{transform_indices = @transform_0, window_bounds = array<i64: 8, 512>}, {pipeline_mode = #tpu.pipeline_mode<synchronous>, transform_indices = @transform_1, window_bounds = array<i64: 8, 512>}, {pipeline_mode = #tpu.pipeline_mode<synchronous>, transform_indices = @transform_2, window_bounds = array<i64: 8, 72>}, {pipeline_mode = #tpu.pipeline_mode<synchronous>, transform_indices = @transform_3, window_bounds = array<i64: 8, 1>}, {pipeline_mode = #tpu.pipeline_mode<synchronous>, transform_indices = @transform_4, window_bounds = array<i64: 8, 72>}, {pipeline_mode = #tpu.pipeline_mode<synchronous>, transform_indices = @transform_5, window_bounds = array<i64: 8, 1>}, {transform_indices = @transform_6, window_bounds = array<i64: 8, 512>}]} {
    %c0 = arith.constant 0 : index
    %c0_0 = arith.constant 0 : index
    %0 = vector.load %arg1[%c0, %c0_0] : memref<8x512xf32, #tpu.memory_space<vmem>>, vector<8x512xf32>
    %cst = arith.constant 0.000000e+00 : f32
    %1 = vector.broadcast %cst : f32 to vector<8x512xf32>
    %2 = arith.maximumf %0, %1 : vector<8x512xf32>
    %c0_1 = arith.constant 0 : index
    %c0_2 = arith.constant 0 : index
    %3 = vector.load %arg3[%c0_1, %c0_2] : memref<8x72xf32, #tpu.memory_space<vmem>>, vector<8x72xf32>
    %c0_3 = arith.constant 0 : index
    %c0_4 = arith.constant 0 : index
    %4 = vector.load %arg4[%c0_3, %c0_4] : memref<8x1xf32, #tpu.memory_space<vmem>>, vector<8x1xf32>
    %c17_i32 = arith.constant 17 : i32
    %5 = tpu.dynamic_rotate %2 by %c17_i32 dim 1 : vector<8x512xf32>, i32 -> vector<8x512xf32>
    %c0_5 = arith.constant 0 : index
    %c0_6 = arith.constant 0 : index
    %6 = vector.load %arg2[%c0_5, %c0_6] : memref<8x512xf32, #tpu.memory_space<vmem>>, vector<1x512xf32>
    %7 = vector.broadcast %6 : vector<1x512xf32> to vector<8x512xf32>
    %8 = arith.mulf %5, %7 : vector<8x512xf32>
    %c0_7 = arith.constant 0 : index
    %c0_8 = arith.constant 0 : index
    %9 = vector.load %arg8[%c0_7, %c0_8] : memref<72x512xf32, #tpu.memory_space<vmem>>, vector<8x512xf32>
    tpu.vector_store %arg8[%c0_7, %c0_8], %8 {strides = array<i32>} : memref<72x512xf32, #tpu.memory_space<vmem>>, vector<8x512xf32>,
    %c16_i32 = arith.constant 16 : i32
    %10 = tpu.dynamic_rotate %2 by %c16_i32 dim 1 : vector<8x512xf32>, i32 -> vector<8x512xf32>
    %c1 = arith.constant 1 : index
    %c0_9 = arith.constant 0 : index
    %11 = vector.load %arg2[%c1, %c0_9] : memref<8x512xf32, #tpu.memory_space<vmem>>, vector<1x512xf32>
    %12 = vector.broadcast %11 : vector<1x512xf32> to vector<8x512xf32>
    %13 = arith.mulf %10, %12 : vector<8x512xf32>
    %c8 = arith.constant 8 : index
    %c0_10 = arith.constant 0 : index
    %14 = vector.load %arg8[%c8, %c0_10] : memref<72x512xf32, #tpu.memory_space<vmem>>, vector<8x512xf32>
    tpu.vector_store %arg8[%c8, %c0_10], %13 {strides = array<i32>} : memref<72x512xf32, #tpu.memory_space<vmem>>, vector<8x512xf32>,
    %c15_i32 = arith.constant 15 : i32
    %15 = tpu.dynamic_rotate %2 by %c15_i32 dim 1 : vector<8x512xf32>, i32 -> vector<8x512xf32>
    %c2 = arith.constant 2 : index
    %c0_11 = arith.constant 0 : index
    %16 = vector.load %arg2[%c2, %c0_11] : memref<8x512xf32, #tpu.memory_space<vmem>>, vector<1x512xf32>
    %17 = vector.broadcast %16 : vector<1x512xf32> to vector<8x512xf32>
    %18 = arith.mulf %15, %17 : vector<8x512xf32>
    %c16 = arith.constant 16 : index
    %c0_12 = arith.constant 0 : index
    %19 = vector.load %arg8[%c16, %c0_12] : memref<72x512xf32, #tpu.memory_space<vmem>>, vector<8x512xf32>
    tpu.vector_store %arg8[%c16, %c0_12], %18 {strides = array<i32>} : memref<72x512xf32, #tpu.memory_space<vmem>>, vector<8x512xf32>,
    %c1_i32 = arith.constant 1 : i32
    %20 = tpu.dynamic_rotate %2 by %c1_i32 dim 1 : vector<8x512xf32>, i32 -> vector<8x512xf32>
    %c3 = arith.constant 3 : index
    %c0_13 = arith.constant 0 : index
    %21 = vector.load %arg2[%c3, %c0_13] : memref<8x512xf32, #tpu.memory_space<vmem>>, vector<1x512xf32>
    %22 = vector.broadcast %21 : vector<1x512xf32> to vector<8x512xf32>
    %23 = arith.mulf %20, %22 : vector<8x512xf32>
    %c24 = arith.constant 24 : index
    %c0_14 = arith.constant 0 : index
    %24 = vector.load %arg8[%c24, %c0_14] : memref<72x512xf32, #tpu.memory_space<vmem>>, vector<8x512xf32>
    tpu.vector_store %arg8[%c24, %c0_14], %23 {strides = array<i32>} : memref<72x512xf32, #tpu.memory_space<vmem>>, vector<8x512xf32>,
    %c32 = arith.constant 32 : index
    %c0_15 = arith.constant 0 : index
    %25 = vector.load %arg8[%c32, %c0_15] : memref<72x512xf32, #tpu.memory_space<vmem>>, vector<8x512xf32>
    tpu.vector_store %arg8[%c32, %c0_15], %2 {strides = array<i32>} : memref<72x512xf32, #tpu.memory_space<vmem>>, vector<8x512xf32>,
    %c511_i32 = arith.constant 511 : i32
    %26 = tpu.dynamic_rotate %2 by %c511_i32 dim 1 : vector<8x512xf32>, i32 -> vector<8x512xf32>
    %c4 = arith.constant 4 : index
    %c0_16 = arith.constant 0 : index
    %27 = vector.load %arg2[%c4, %c0_16] : memref<8x512xf32, #tpu.memory_space<vmem>>, vector<1x512xf32>
    %28 = vector.broadcast %27 : vector<1x512xf32> to vector<8x512xf32>
    %29 = arith.mulf %26, %28 : vector<8x512xf32>
    %c40 = arith.constant 40 : index
    %c0_17 = arith.constant 0 : index
    %30 = vector.load %arg8[%c40, %c0_17] : memref<72x512xf32, #tpu.memory_space<vmem>>, vector<8x512xf32>
    tpu.vector_store %arg8[%c40, %c0_17], %29 {strides = array<i32>} : memref<72x512xf32, #tpu.memory_space<vmem>>, vector<8x512xf32>,
    %c497_i32 = arith.constant 497 : i32
    %31 = tpu.dynamic_rotate %2 by %c497_i32 dim 1 : vector<8x512xf32>, i32 -> vector<8x512xf32>
    %c5 = arith.constant 5 : index
    %c0_18 = arith.constant 0 : index
    %32 = vector.load %arg2[%c5, %c0_18] : memref<8x512xf32, #tpu.memory_space<vmem>>, vector<1x512xf32>
    %33 = vector.broadcast %32 : vector<1x512xf32> to vector<8x512xf32>
    %34 = arith.mulf %31, %33 : vector<8x512xf32>
    %c48 = arith.constant 48 : index
    %c0_19 = arith.constant 0 : index
    %35 = vector.load %arg8[%c48, %c0_19] : memref<72x512xf32, #tpu.memory_space<vmem>>, vector<8x512xf32>
    tpu.vector_store %arg8[%c48, %c0_19], %34 {strides = array<i32>} : memref<72x512xf32, #tpu.memory_space<vmem>>, vector<8x512xf32>,
    %c496_i32 = arith.constant 496 : i32
    %36 = tpu.dynamic_rotate %2 by %c496_i32 dim 1 : vector<8x512xf32>, i32 -> vector<8x512xf32>
    %c6 = arith.constant 6 : index
    %c0_20 = arith.constant 0 : index
    %37 = vector.load %arg2[%c6, %c0_20] : memref<8x512xf32, #tpu.memory_space<vmem>>, vector<1x512xf32>
    %38 = vector.broadcast %37 : vector<1x512xf32> to vector<8x512xf32>
    %39 = arith.mulf %36, %38 : vector<8x512xf32>
    %c56 = arith.constant 56 : index
    %c0_21 = arith.constant 0 : index
    %40 = vector.load %arg8[%c56, %c0_21] : memref<72x512xf32, #tpu.memory_space<vmem>>, vector<8x512xf32>
    tpu.vector_store %arg8[%c56, %c0_21], %39 {strides = array<i32>} : memref<72x512xf32, #tpu.memory_space<vmem>>, vector<8x512xf32>,
    %c495_i32 = arith.constant 495 : i32
    %41 = tpu.dynamic_rotate %2 by %c495_i32 dim 1 : vector<8x512xf32>, i32 -> vector<8x512xf32>
    %c7 = arith.constant 7 : index
    %c0_22 = arith.constant 0 : index
    %42 = vector.load %arg2[%c7, %c0_22] : memref<8x512xf32, #tpu.memory_space<vmem>>, vector<1x512xf32>
    %43 = vector.broadcast %42 : vector<1x512xf32> to vector<8x512xf32>
    %44 = arith.mulf %41, %43 : vector<8x512xf32>
    %c64 = arith.constant 64 : index
    %c0_23 = arith.constant 0 : index
    %45 = vector.load %arg8[%c64, %c0_23] : memref<72x512xf32, #tpu.memory_space<vmem>>, vector<8x512xf32>
    tpu.vector_store %arg8[%c64, %c0_23], %44 {strides = array<i32>} : memref<72x512xf32, #tpu.memory_space<vmem>>, vector<8x512xf32>,
    %c0_24 = arith.constant 0 : index
    %c0_25 = arith.constant 0 : index
    %46 = vector.load %arg8[%c0_24, %c0_25] : memref<72x512xf32, #tpu.memory_space<vmem>>, vector<72x512xf32>
    %cst_26 = arith.constant dense<0.000000e+00> : vector<8x512xf32>
    %47 = tpu.matmul %3, %46, %cst_26 {dimension_numbers = #tpu.dot_dimension_numbers<[1], [0], [0], [1], [0, 0, 1, 1], [], []>} : vector<8x72xf32>, vector<72x512xf32>, vector<8x512xf32> -> vector<8x512xf32>
    %48 = vector.broadcast %4 : vector<8x1xf32> to vector<8x512xf32>
    %49 = arith.addf %47, %48 : vector<8x512xf32>
    %cst_27 = arith.constant 0.000000e+00 : f32
    %50 = vector.broadcast %cst_27 : f32 to vector<8x512xf32>
    %51 = arith.maximumf %49, %50 : vector<8x512xf32>
    %c0_28 = arith.constant 0 : index
    %c0_29 = arith.constant 0 : index
    %52 = vector.load %arg5[%c0_28, %c0_29] : memref<8x72xf32, #tpu.memory_space<vmem>>, vector<8x72xf32>
    %c0_30 = arith.constant 0 : index
    %c0_31 = arith.constant 0 : index
    %53 = vector.load %arg6[%c0_30, %c0_31] : memref<8x1xf32, #tpu.memory_space<vmem>>, vector<8x1xf32>
    %c17_i32_32 = arith.constant 17 : i32
    %54 = tpu.dynamic_rotate %51 by %c17_i32_32 dim 1 : vector<8x512xf32>, i32 -> vector<8x512xf32>
    %c0_33 = arith.constant 0 : index
    %c0_34 = arith.constant 0 : index
    %55 = vector.load %arg2[%c0_33, %c0_34] : memref<8x512xf32, #tpu.memory_space<vmem>>, vector<1x512xf32>
    %56 = vector.broadcast %55 : vector<1x512xf32> to vector<8x512xf32>
    %57 = arith.mulf %54, %56 : vector<8x512xf32>
    %c0_35 = arith.constant 0 : index
    %c0_36 = arith.constant 0 : index
    %58 = vector.load %arg8[%c0_35, %c0_36] : memref<72x512xf32, #tpu.memory_space<vmem>>, vector<8x512xf32>
    tpu.vector_store %arg8[%c0_35, %c0_36], %57 {strides = array<i32>} : memref<72x512xf32, #tpu.memory_space<vmem>>, vector<8x512xf32>,
    %c16_i32_37 = arith.constant 16 : i32
    %59 = tpu.dynamic_rotate %51 by %c16_i32_37 dim 1 : vector<8x512xf32>, i32 -> vector<8x512xf32>
    %c1_38 = arith.constant 1 : index
    %c0_39 = arith.constant 0 : index
    %60 = vector.load %arg2[%c1_38, %c0_39] : memref<8x512xf32, #tpu.memory_space<vmem>>, vector<1x512xf32>
    %61 = vector.broadcast %60 : vector<1x512xf32> to vector<8x512xf32>
    %62 = arith.mulf %59, %61 : vector<8x512xf32>
    %c8_40 = arith.constant 8 : index
    %c0_41 = arith.constant 0 : index
    %63 = vector.load %arg8[%c8_40, %c0_41] : memref<72x512xf32, #tpu.memory_space<vmem>>, vector<8x512xf32>
    tpu.vector_store %arg8[%c8_40, %c0_41], %62 {strides = array<i32>} : memref<72x512xf32, #tpu.memory_space<vmem>>, vector<8x512xf32>,
    %c15_i32_42 = arith.constant 15 : i32
    %64 = tpu.dynamic_rotate %51 by %c15_i32_42 dim 1 : vector<8x512xf32>, i32 -> vector<8x512xf32>
    %c2_43 = arith.constant 2 : index
    %c0_44 = arith.constant 0 : index
    %65 = vector.load %arg2[%c2_43, %c0_44] : memref<8x512xf32, #tpu.memory_space<vmem>>, vector<1x512xf32>
    %66 = vector.broadcast %65 : vector<1x512xf32> to vector<8x512xf32>
    %67 = arith.mulf %64, %66 : vector<8x512xf32>
    %c16_45 = arith.constant 16 : index
    %c0_46 = arith.constant 0 : index
    %68 = vector.load %arg8[%c16_45, %c0_46] : memref<72x512xf32, #tpu.memory_space<vmem>>, vector<8x512xf32>
    tpu.vector_store %arg8[%c16_45, %c0_46], %67 {strides = array<i32>} : memref<72x512xf32, #tpu.memory_space<vmem>>, vector<8x512xf32>,
    %c1_i32_47 = arith.constant 1 : i32
    %69 = tpu.dynamic_rotate %51 by %c1_i32_47 dim 1 : vector<8x512xf32>, i32 -> vector<8x512xf32>
    %c3_48 = arith.constant 3 : index
    %c0_49 = arith.constant 0 : index
    %70 = vector.load %arg2[%c3_48, %c0_49] : memref<8x512xf32, #tpu.memory_space<vmem>>, vector<1x512xf32>
    %71 = vector.broadcast %70 : vector<1x512xf32> to vector<8x512xf32>
    %72 = arith.mulf %69, %71 : vector<8x512xf32>
    %c24_50 = arith.constant 24 : index
    %c0_51 = arith.constant 0 : index
    %73 = vector.load %arg8[%c24_50, %c0_51] : memref<72x512xf32, #tpu.memory_space<vmem>>, vector<8x512xf32>
    tpu.vector_store %arg8[%c24_50, %c0_51], %72 {strides = array<i32>} : memref<72x512xf32, #tpu.memory_space<vmem>>, vector<8x512xf32>,
    %c32_52 = arith.constant 32 : index
    %c0_53 = arith.constant 0 : index
    %74 = vector.load %arg8[%c32_52, %c0_53] : memref<72x512xf32, #tpu.memory_space<vmem>>, vector<8x512xf32>
    tpu.vector_store %arg8[%c32_52, %c0_53], %51 {strides = array<i32>} : memref<72x512xf32, #tpu.memory_space<vmem>>, vector<8x512xf32>,
    %c511_i32_54 = arith.constant 511 : i32
    %75 = tpu.dynamic_rotate %51 by %c511_i32_54 dim 1 : vector<8x512xf32>, i32 -> vector<8x512xf32>
    %c4_55 = arith.constant 4 : index
    %c0_56 = arith.constant 0 : index
    %76 = vector.load %arg2[%c4_55, %c0_56] : memref<8x512xf32, #tpu.memory_space<vmem>>, vector<1x512xf32>
    %77 = vector.broadcast %76 : vector<1x512xf32> to vector<8x512xf32>
    %78 = arith.mulf %75, %77 : vector<8x512xf32>
    %c40_57 = arith.constant 40 : index
    %c0_58 = arith.constant 0 : index
    %79 = vector.load %arg8[%c40_57, %c0_58] : memref<72x512xf32, #tpu.memory_space<vmem>>, vector<8x512xf32>
    tpu.vector_store %arg8[%c40_57, %c0_58], %78 {strides = array<i32>} : memref<72x512xf32, #tpu.memory_space<vmem>>, vector<8x512xf32>,
    %c497_i32_59 = arith.constant 497 : i32
    %80 = tpu.dynamic_rotate %51 by %c497_i32_59 dim 1 : vector<8x512xf32>, i32 -> vector<8x512xf32>
    %c5_60 = arith.constant 5 : index
    %c0_61 = arith.constant 0 : index
    %81 = vector.load %arg2[%c5_60, %c0_61] : memref<8x512xf32, #tpu.memory_space<vmem>>, vector<1x512xf32>
    %82 = vector.broadcast %81 : vector<1x512xf32> to vector<8x512xf32>
    %83 = arith.mulf %80, %82 : vector<8x512xf32>
    %c48_62 = arith.constant 48 : index
    %c0_63 = arith.constant 0 : index
    %84 = vector.load %arg8[%c48_62, %c0_63] : memref<72x512xf32, #tpu.memory_space<vmem>>, vector<8x512xf32>
    tpu.vector_store %arg8[%c48_62, %c0_63], %83 {strides = array<i32>} : memref<72x512xf32, #tpu.memory_space<vmem>>, vector<8x512xf32>,
    %c496_i32_64 = arith.constant 496 : i32
    %85 = tpu.dynamic_rotate %51 by %c496_i32_64 dim 1 : vector<8x512xf32>, i32 -> vector<8x512xf32>
    %c6_65 = arith.constant 6 : index
    %c0_66 = arith.constant 0 : index
    %86 = vector.load %arg2[%c6_65, %c0_66] : memref<8x512xf32, #tpu.memory_space<vmem>>, vector<1x512xf32>
    %87 = vector.broadcast %86 : vector<1x512xf32> to vector<8x512xf32>
    %88 = arith.mulf %85, %87 : vector<8x512xf32>
    %c56_67 = arith.constant 56 : index
    %c0_68 = arith.constant 0 : index
    %89 = vector.load %arg8[%c56_67, %c0_68] : memref<72x512xf32, #tpu.memory_space<vmem>>, vector<8x512xf32>
    tpu.vector_store %arg8[%c56_67, %c0_68], %88 {strides = array<i32>} : memref<72x512xf32, #tpu.memory_space<vmem>>, vector<8x512xf32>,
    %c495_i32_69 = arith.constant 495 : i32
    %90 = tpu.dynamic_rotate %51 by %c495_i32_69 dim 1 : vector<8x512xf32>, i32 -> vector<8x512xf32>
    %c7_70 = arith.constant 7 : index
    %c0_71 = arith.constant 0 : index
    %91 = vector.load %arg2[%c7_70, %c0_71] : memref<8x512xf32, #tpu.memory_space<vmem>>, vector<1x512xf32>
    %92 = vector.broadcast %91 : vector<1x512xf32> to vector<8x512xf32>
    %93 = arith.mulf %90, %92 : vector<8x512xf32>
    %c64_72 = arith.constant 64 : index
    %c0_73 = arith.constant 0 : index
    %94 = vector.load %arg8[%c64_72, %c0_73] : memref<72x512xf32, #tpu.memory_space<vmem>>, vector<8x512xf32>
    tpu.vector_store %arg8[%c64_72, %c0_73], %93 {strides = array<i32>} : memref<72x512xf32, #tpu.memory_space<vmem>>, vector<8x512xf32>,
    %c0_74 = arith.constant 0 : index
    %c0_75 = arith.constant 0 : index
    %95 = vector.load %arg8[%c0_74, %c0_75] : memref<72x512xf32, #tpu.memory_space<vmem>>, vector<72x512xf32>
    %cst_76 = arith.constant dense<0.000000e+00> : vector<8x512xf32>
    %96 = tpu.matmul %52, %95, %cst_76 {dimension_numbers = #tpu.dot_dimension_numbers<[1], [0], [0], [1], [0, 0, 1, 1], [], []>} : vector<8x72xf32>, vector<72x512xf32>, vector<8x512xf32> -> vector<8x512xf32>
    %97 = vector.broadcast %53 : vector<8x1xf32> to vector<8x512xf32>
    %98 = arith.addf %96, %97 : vector<8x512xf32>
    %99 = arith.addf %98, %0 : vector<8x512xf32>
    %c0_77 = arith.constant 0 : index
    %c0_78 = arith.constant 0 : index
    %100 = vector.load %arg7[%c0_77, %c0_78] : memref<8x512xf32, #tpu.memory_space<vmem>>, vector<8x512xf32>
    tpu.vector_store %arg7[%c0_77, %c0_78], %99 {strides = array<i32>} : memref<8x512xf32, #tpu.memory_space<vmem>>, vector<8x512xf32>,
    return
  }
  func.func @transform_0(%arg0: i32) -> (i32, i32) {
    %c0_i32 = arith.constant 0 : i32
    %c0_i32_0 = arith.constant 0 : i32
    return %c0_i32, %arg0 : i32, i32
  }
  func.func @transform_1(%arg0: i32) -> (i32, i32) {
    %c0_i32 = arith.constant 0 : i32
    %c0_i32_0 = arith.constant 0 : i32
    %c0_i32_1 = arith.constant 0 : i32
    return %c0_i32, %c0_i32_0 : i32, i32
  }
  func.func @transform_2(%arg0: i32) -> (i32, i32) {
    %c0_i32 = arith.constant 0 : i32
    %c0_i32_0 = arith.constant 0 : i32
    %c0_i32_1 = arith.constant 0 : i32
    return %c0_i32, %c0_i32_0 : i32, i32
  }
  func.func @transform_3(%arg0: i32) -> (i32, i32) {
    %c0_i32 = arith.constant 0 : i32
    %c0_i32_0 = arith.constant 0 : i32
    %c0_i32_1 = arith.constant 0 : i32
    return %c0_i32, %c0_i32_0 : i32, i32
  }
  func.func @transform_4(%arg0: i32) -> (i32, i32) {
    %c0_i32 = arith.constant 0 : i32
    %c0_i32_0 = arith.constant 0 : i32
    %c0_i32_1 = arith.constant 0 : i32
    return %c0_i32, %c0_i32_0 : i32, i32
  }
  func.func @transform_5(%arg0: i32) -> (i32, i32) {
    %c0_i32 = arith.constant 0 : i32
    %c0_i32_0 = arith.constant 0 : i32
    %c0_i32_1 = arith.constant 0 : i32
    return %c0_i32, %c0_i32_0 : i32, i32
  }
  func.func @transform_6(%arg0: i32) -> (i32, i32) {
    %c0_i32 = arith.constant 0 : i32
    %c0_i32_0 = arith.constant 0 : i32
    return %c0_i32, %arg0 : i32, i32
  }
}

</mosaic_0001>

<llo_original>
// kernel: tpu_custom_call.1
$region0: #{tpu_custom_call.1}
  #allocation0 [shape = 'u32[]', space=smem, size = 0x4, offset = 0x4, fixed_abs, tag = 'smem constant byte address 0x4 - core index']
  #allocation1 [shape = 'u32[144,128]{1,0:T(1,128)}', space=vmem, size = 0x12000, scoped, tag = 'internal scratch']
  #allocation2 [shape = 'f32[72,512]{1,0:T(8,128)}', space=vmem, size = 0x24000, scoped, tag = 'scratch operand']
  %s0 = inlined_call_operand.hbm [shape: f32[8,512], index: 0, kind: input, shape index: {}]
  %s1 = inlined_call_operand.hbm [shape: f32[8,512], index: 1, kind: input, shape index: {}]
  %s2 = inlined_call_operand.vmem [shape: f32[8,72], index: 2, kind: input, shape index: {}]
  %s3 = inlined_call_operand.vmem [shape: f32[8,1], index: 3, kind: input, shape index: {}]
  %s4 = inlined_call_operand.vmem [shape: f32[8,72], index: 4, kind: input, shape index: {}]
  %s5 = inlined_call_operand.vmem [shape: f32[8,1], index: 5, kind: input, shape index: {}]
  %s6 = inlined_call_operand.hbm [shape: f32[8,512], index: 6, kind: output, shape index: {}]
  %s7 = sld [smem:[#allocation0]]
  $region42: #{tpu_custom_call.1} parent=0
    _
  %s9 = ssub.s32 1, %s7
  %s10 = scalar_select 0, %s9, %s7
  $region1: #{tpu_custom_call.1} parent=0
    #allocation3 [shape = 'u8[16384]{0}', space=vmem, size = 0x4000, scoped, tag = 'input window, operand 0, single buffered']
    #allocation4 [shape = 's32[1]{0}', space=sflag, size = 0x4, scoped, tag = 'scoped memory for tpu_custom_call.1']
    #allocation5 [shape = 's32[1]{0}', space=sflag, size = 0x4, scoped, tag = 'scoped memory for tpu_custom_call.1']
    #allocation6 [shape = 'u8[16384]{0}', space=vmem, size = 0x4000, scoped, tag = 'input window, operand 1, single buffered']
    #allocation7 [shape = 's32[1]{0}', space=sflag, size = 0x4, scoped, tag = 'scoped memory for tpu_custom_call.1']
    #allocation8 [shape = 'u8[16384]{0}', space=vmem, size = 0x4000, scoped, tag = 'output window, operand 0, single buffered']
    %11 = vsyncpa [#allocation4], 0
    %12 = vsyncpa [#allocation7], 0
    %13 = vsyncpa [#allocation5], 0
    // Predicated region
    $region2: #{tpu_custom_call.1} parent=1 // pred_check
      _
    $region3: #{tpu_custom_call.1} parent=1 // pred_check_branch
      %15 = sbr.rel (0) target = $region5
    $region4: #{tpu_custom_call.1} parent=1 // pred_region
      %s17 = ssub.s32 512, 512
      %18 = vsyncadd [#allocation4], %s17
      %s20 = sshll.u32 [#allocation3], 4
      %s21 = int_to_ptr.vmem [resolvable:$true] %s20
      %23 = dma.hbm_to_vmem [thread:$0]  %s0, 512, %s21, [#allocation4]
    $region5: #{tpu_custom_call.1} parent=1 // pred_fallthru
      _
    // Predicated region
    $region6: #{tpu_custom_call.1} parent=1 // pred_check
      _
    $region7: #{tpu_custom_call.1} parent=1 // pred_check_branch
      %25 = sbr.rel (0) target = $region9
    $region8: #{tpu_custom_call.1} parent=1 // pred_region
      %s27 = ssub.s32 512, 512
      %28 = vsyncadd [#allocation7], %s27
      %s30 = sshll.u32 [#allocation6], 4
      %s31 = int_to_ptr.vmem [resolvable:$true] %s30
      %33 = dma.hbm_to_vmem [thread:$0]  %s1, 512, %s31, [#allocation7]
    $region9: #{tpu_custom_call.1} parent=1 // pred_fallthru
      _
    // Predicated region
    $region10: #{tpu_custom_call.1} parent=1 // pred_check
      _
    $region11: #{tpu_custom_call.1} parent=1 // pred_check_branch
      %35 = sbr.rel (0) target = $region13
    $region12: #{tpu_custom_call.1} parent=1 // pred_region
      _
    $region13: #{tpu_custom_call.1} parent=1 // pred_fallthru
      _
    // Predicated region
    $region14: #{tpu_custom_call.1} parent=1 // pred_check
      _
    $region15: #{tpu_custom_call.1} parent=1 // pred_check_branch
      %37 = sbr.rel (0) target = $region17
    $region16: #{tpu_custom_call.1} parent=1 // pred_region
      _
    $region17: #{tpu_custom_call.1} parent=1 // pred_fallthru
      _
    // Predicated region
    $region18: #{tpu_custom_call.1} parent=1 // pred_check
      _
    $region19: #{tpu_custom_call.1} parent=1 // pred_check_branch
      %39 = sbr.rel (0) target = $region21
    $region20: #{tpu_custom_call.1} parent=1 // pred_region
      _
    $region21: #{tpu_custom_call.1} parent=1 // pred_fallthru
      _
    // Predicated region
    $region22: #{tpu_custom_call.1} parent=1 // pred_check
      _
    $region23: #{tpu_custom_call.1} parent=1 // pred_check_branch
      %41 = sbr.rel (0) target = $region25
    $region24: #{tpu_custom_call.1} parent=1 // pred_region
      _
    $region25: #{tpu_custom_call.1} parent=1 // pred_fallthru
      _
    // Predicated region
    $region26: #{tpu_custom_call.1} parent=1 // pred_check
      _
    $region27: #{tpu_custom_call.1} parent=1 // pred_check_branch
      %43 = sbr.rel (0) target = $region29
    $region28: #{tpu_custom_call.1} parent=1 // pred_region
      %44 = dma.done [#allocation4], 512
    $region29: #{tpu_custom_call.1} parent=1 // pred_fallthru
      _
    // Predicated region
    $region30: #{tpu_custom_call.1} parent=1 // pred_check
      _
    $region31: #{tpu_custom_call.1} parent=1 // pred_check_branch
      %46 = sbr.rel (0) target = $region33
    $region32: #{tpu_custom_call.1} parent=1 // pred_region
      %47 = dma.done [#allocation7], 512
    $region33: #{tpu_custom_call.1} parent=1 // pred_fallthru
      _
    %v48 = vld [vmem:[#allocation3] sm:$0xff]
    %v49 = vld [vmem:[#allocation3 + $0x8] sm:$0xff]
    %v50 = vld [vmem:[#allocation3 + $0x10] sm:$0xff]
    %v51 = vld [vmem:[#allocation3 + $0x18] sm:$0xff]
    %v52 = vmax.f32 %v48, 0.0
    %v53 = vmax.f32 %v49, 0.0
    %v54 = vmax.f32 %v50, 0.0
    %v55 = vmax.f32 %v51, 0.0
    %v56 = vld [vmem:[%s2] sm:$0xff]
    %v57 = vld [vmem:[%s3] sm:$0xff]
    %58 = vrot.lane.b32.xlu0 %v52, 17
    %v59 = vpop.permute.xlu0 %58
    %60 = vrot.lane.b32.xlu0 %v53, 17
    %v61 = vpop.permute.xlu0 %60
    %62 = vrot.lane.b32.xlu0 %v54, 17
    %v63 = vpop.permute.xlu0 %62
    %64 = vrot.lane.b32.xlu0 %v55, 17
    %v65 = vpop.permute.xlu0 %64
    %v66 = vlaneseq
    %v67 = vand.u32 %v66, 127
    %vm68 = vcmp.lt.s32.totalorder %v67, 17
    %v69 = vsel %vm68, %v63, %v65
    %v70 = vsel %vm68, %v61, %v63
    %v71 = vsel %vm68, %v59, %v61
    %v72 = vsel %vm68, %v65, %v59
    %v73 = vld [vmem:[#allocation6] ss:$8 sm:$0xf]
    %v75 = vlaneseq
    %v76 = vshrl.u32 %v75, 7
    %v77 = vsub.s32 0, %v76
    %v78 = vrot.slane %v73, %v77
    %v79 = vlaneseq
    %v80 = vshrl.u32 %v79, 7
    %v81 = vsub.s32 1, %v80
    %v82 = vrot.slane %v73, %v81
    %v83 = vlaneseq
    %v84 = vshrl.u32 %v83, 7
    %v85 = vsub.s32 2, %v84
    %v86 = vrot.slane %v73, %v85
    %v87 = vlaneseq
    %v88 = vshrl.u32 %v87, 7
    %v89 = vsub.s32 3, %v88
    %v90 = vrot.slane %v73, %v89
    %v95 = vmul.f32 %v72, %v78
    %v96 = vmul.f32 %v71, %v82
    %v97 = vmul.f32 %v70, %v86
    %v98 = vmul.f32 %v69, %v90
    %99 = vst [vmem:[#allocation2] sm:$0xff] %v95
    %100 = vst [vmem:[#allocation2 + $0x8] sm:$0xff] %v96
    %101 = vst [vmem:[#allocation2 + $0x10] sm:$0xff] %v97
    %102 = vst [vmem:[#allocation2 + $0x18] sm:$0xff] %v98
    %103 = vrot.lane.b32.xlu0 %v52, 16
    %v104 = vpop.permute.xlu0 %103
    %105 = vrot.lane.b32.xlu0 %v53, 16
    %v106 = vpop.permute.xlu0 %105
    %107 = vrot.lane.b32.xlu0 %v54, 16
    %v108 = vpop.permute.xlu0 %107
    %109 = vrot.lane.b32.xlu0 %v55, 16
    %v110 = vpop.permute.xlu0 %109
    %vm111 = vcmp.lt.s32.totalorder %v67, 16
    %v112 = vsel %vm111, %v108, %v110
    %v113 = vsel %vm111, %v106, %v108
    %v114 = vsel %vm111, %v104, %v106
    %v115 = vsel %vm111, %v110, %v104
    %s116 = scalar_lea.vmem [#allocation6], 1
    %v117 = vld [vmem:[%s116] ss:$8 sm:$0xf]
    %v119 = vlaneseq
    %v120 = vshrl.u32 %v119, 7
    %v121 = vsub.s32 0, %v120
    %v122 = vrot.slane %v117, %v121
    %v123 = vlaneseq
    %v124 = vshrl.u32 %v123, 7
    %v125 = vsub.s32 1, %v124
    %v126 = vrot.slane %v117, %v125
    %v127 = vlaneseq
    %v128 = vshrl.u32 %v127, 7
    %v129 = vsub.s32 2, %v128
    %v130 = vrot.slane %v117, %v129
    %v131 = vlaneseq
    %v132 = vshrl.u32 %v131, 7
    %v133 = vsub.s32 3, %v132
    %v134 = vrot.slane %v117, %v133
    %v139 = vmul.f32 %v115, %v122
    %v140 = vmul.f32 %v114, %v126
    %v141 = vmul.f32 %v113, %v130
    %v142 = vmul.f32 %v112, %v134
    %143 = vst [vmem:[#allocation2 + $0x20] sm:$0xff] %v139
    %144 = vst [vmem:[#allocation2 + $0x28] sm:$0xff] %v140
    %145 = vst [vmem:[#allocation2 + $0x30] sm:$0xff] %v141
    %146 = vst [vmem:[#allocation2 + $0x38] sm:$0xff] %v142
    %147 = vrot.lane.b32.xlu0 %v52, 15
    %v148 = vpop.permute.xlu0 %147
    %149 = vrot.lane.b32.xlu0 %v53, 15
    %v150 = vpop.permute.xlu0 %149
    %151 = vrot.lane.b32.xlu0 %v54, 15
    %v152 = vpop.permute.xlu0 %151
    %153 = vrot.lane.b32.xlu0 %v55, 15
    %v154 = vpop.permute.xlu0 %153
    %vm155 = vcmp.lt.s32.totalorder %v67, 15
    %v156 = vsel %vm155, %v152, %v154
    %v157 = vsel %vm155, %v150, %v152
    %v158 = vsel %vm155, %v148, %v150
    %v159 = vsel %vm155, %v154, %v148
    %s160 = scalar_lea.vmem [#allocation6], 2
    %v161 = vld [vmem:[%s160] ss:$8 sm:$0xf]
    %v163 = vlaneseq
    %v164 = vshrl.u32 %v163, 7
    %v165 = vsub.s32 0, %v164
    %v166 = vrot.slane %v161, %v165
    %v167 = vlaneseq
    %v168 = vshrl.u32 %v167, 7
    %v169 = vsub.s32 1, %v168
    %v170 = vrot.slane %v161, %v169
    %v171 = vlaneseq
    %v172 = vshrl.u32 %v171, 7
    %v173 = vsub.s32 2, %v172
    %v174 = vrot.slane %v161, %v173
    %v175 = vlaneseq
    %v176 = vshrl.u32 %v175, 7
    %v177 = vsub.s32 3, %v176
    %v178 = vrot.slane %v161, %v177
    %v183 = vmul.f32 %v159, %v166
    %v184 = vmul.f32 %v158, %v170
    %v185 = vmul.f32 %v157, %v174
    %v186 = vmul.f32 %v156, %v178
    %187 = vst [vmem:[#allocation2 + $0x40] sm:$0xff] %v183
    %188 = vst [vmem:[#allocation2 + $0x48] sm:$0xff] %v184
    %189 = vst [vmem:[#allocation2 + $0x50] sm:$0xff] %v185
    %190 = vst [vmem:[#allocation2 + $0x58] sm:$0xff] %v186
    %191 = vrot.lane.b32.xlu0 %v52, 1
    %v192 = vpop.permute.xlu0 %191
    %193 = vrot.lane.b32.xlu0 %v53, 1
    %v194 = vpop.permute.xlu0 %193
    %195 = vrot.lane.b32.xlu0 %v54, 1
    %v196 = vpop.permute.xlu0 %195
    %197 = vrot.lane.b32.xlu0 %v55, 1
    %v198 = vpop.permute.xlu0 %197
    %vm199 = vcmp.lt.s32.totalorder %v67, 1
    %v200 = vsel %vm199, %v196, %v198
    %v201 = vsel %vm199, %v194, %v196
    %v202 = vsel %vm199, %v192, %v194
    %v203 = vsel %vm199, %v198, %v192
    %s204 = scalar_lea.vmem [#allocation6], 3
    %v205 = vld [vmem:[%s204] ss:$8 sm:$0xf]
    %v207 = vlaneseq
    %v208 = vshrl.u32 %v207, 7
    %v209 = vsub.s32 0, %v208
    %v210 = vrot.slane %v205, %v209
    %v211 = vlaneseq
    %v212 = vshrl.u32 %v211, 7
    %v213 = vsub.s32 1, %v212
    %v214 = vrot.slane %v205, %v213
    %v215 = vlaneseq
    %v216 = vshrl.u32 %v215, 7
    %v217 = vsub.s32 2, %v216
    %v218 = vrot.slane %v205, %v217
    %v219 = vlaneseq
    %v220 = vshrl.u32 %v219, 7
    %v221 = vsub.s32 3, %v220
    %v222 = vrot.slane %v205, %v221
    %v227 = vmul.f32 %v203, %v210
    %v228 = vmul.f32 %v202, %v214
    %v229 = vmul.f32 %v201, %v218
    %v230 = vmul.f32 %v200, %v222
    %231 = vst [vmem:[#allocation2 + $0x60] sm:$0xff] %v227
    %232 = vst [vmem:[#allocation2 + $0x68] sm:$0xff] %v228
    %233 = vst [vmem:[#allocation2 + $0x70] sm:$0xff] %v229
    %234 = vst [vmem:[#allocation2 + $0x78] sm:$0xff] %v230
    %235 = vst [vmem:[#allocation2 + $0x80] sm:$0xff] %v52
    %236 = vst [vmem:[#allocation2 + $0x88] sm:$0xff] %v53
    %237 = vst [vmem:[#allocation2 + $0x90] sm:$0xff] %v54
    %238 = vst [vmem:[#allocation2 + $0x98] sm:$0xff] %v55
    %239 = vrot.lane.b32.xlu0 %v52, 127
    %v240 = vpop.permute.xlu0 %239
    %241 = vrot.lane.b32.xlu0 %v53, 127
    %v242 = vpop.permute.xlu0 %241
    %243 = vrot.lane.b32.xlu0 %v54, 127
    %v244 = vpop.permute.xlu0 %243
    %245 = vrot.lane.b32.xlu0 %v55, 127
    %v246 = vpop.permute.xlu0 %245
    %vm247 = vcmp.lt.s32.totalorder %v67, 127
    %v248 = vsel %vm247, %v244, %v246
    %v249 = vsel %vm247, %v242, %v244
    %v250 = vsel %vm247, %v240, %v242
    %v251 = vsel %vm247, %v246, %v240
    %s252 = scalar_lea.vmem [#allocation6], 4
    %v253 = vld [vmem:[%s252] ss:$8 sm:$0xf]
    %v255 = vlaneseq
    %v256 = vshrl.u32 %v255, 7
    %v257 = vsub.s32 0, %v256
    %v258 = vrot.slane %v253, %v257
    %v259 = vlaneseq
    %v260 = vshrl.u32 %v259, 7
    %v261 = vsub.s32 1, %v260
    %v262 = vrot.slane %v253, %v261
    %v263 = vlaneseq
    %v264 = vshrl.u32 %v263, 7
    %v265 = vsub.s32 2, %v264
    %v266 = vrot.slane %v253, %v265
    %v267 = vlaneseq
    %v268 = vshrl.u32 %v267, 7
    %v269 = vsub.s32 3, %v268
    %v270 = vrot.slane %v253, %v269
    %v275 = vmul.f32 %v250, %v258
    %v276 = vmul.f32 %v249, %v262
    %v277 = vmul.f32 %v248, %v266
    %v278 = vmul.f32 %v251, %v270
    %279 = vst [vmem:[#allocation2 + $0xa0] sm:$0xff] %v275
    %280 = vst [vmem:[#allocation2 + $0xa8] sm:$0xff] %v276
    %281 = vst [vmem:[#allocation2 + $0xb0] sm:$0xff] %v277
    %282 = vst [vmem:[#allocation2 + $0xb8] sm:$0xff] %v278
    %283 = vrot.lane.b32.xlu0 %v52, 113
    %v284 = vpop.permute.xlu0 %283
    %285 = vrot.lane.b32.xlu0 %v53, 113
    %v286 = vpop.permute.xlu0 %285
    %287 = vrot.lane.b32.xlu0 %v54, 113
    %v288 = vpop.permute.xlu0 %287
    %289 = vrot.lane.b32.xlu0 %v55, 113
    %v290 = vpop.permute.xlu0 %289
    %vm291 = vcmp.lt.s32.totalorder %v67, 113
    %v292 = vsel %vm291, %v288, %v290
    %v293 = vsel %vm291, %v286, %v288
    %v294 = vsel %vm291, %v284, %v286
    %v295 = vsel %vm291, %v290, %v284
    %s296 = scalar_lea.vmem [#allocation6], 5
    %v297 = vld [vmem:[%s296] ss:$8 sm:$0xf]
    %v299 = vlaneseq
    %v300 = vshrl.u32 %v299, 7
    %v301 = vsub.s32 0, %v300
    %v302 = vrot.slane %v297, %v301
    %v303 = vlaneseq
    %v304 = vshrl.u32 %v303, 7
    %v305 = vsub.s32 1, %v304
    %v306 = vrot.slane %v297, %v305
    %v307 = vlaneseq
    %v308 = vshrl.u32 %v307, 7
    %v309 = vsub.s32 2, %v308
    %v310 = vrot.slane %v297, %v309
    %v311 = vlaneseq
    %v312 = vshrl.u32 %v311, 7
    %v313 = vsub.s32 3, %v312
    %v314 = vrot.slane %v297, %v313
    %v319 = vmul.f32 %v294, %v302
    %v320 = vmul.f32 %v293, %v306
    %v321 = vmul.f32 %v292, %v310
    %v322 = vmul.f32 %v295, %v314
    %323 = vst [vmem:[#allocation2 + $0xc0] sm:$0xff] %v319
    %324 = vst [vmem:[#allocation2 + $0xc8] sm:$0xff] %v320
    %325 = vst [vmem:[#allocation2 + $0xd0] sm:$0xff] %v321
    %326 = vst [vmem:[#allocation2 + $0xd8] sm:$0xff] %v322
    %327 = vrot.lane.b32.xlu0 %v52, 112
    %v328 = vpop.permute.xlu0 %327
    %329 = vrot.lane.b32.xlu0 %v53, 112
    %v330 = vpop.permute.xlu0 %329
    %331 = vrot.lane.b32.xlu0 %v54, 112
    %v332 = vpop.permute.xlu0 %331
    %333 = vrot.lane.b32.xlu0 %v55, 112
    %v334 = vpop.permute.xlu0 %333
    %vm335 = vcmp.lt.s32.totalorder %v67, 112
    %v336 = vsel %vm335, %v332, %v334
    %v337 = vsel %vm335, %v330, %v332
    %v338 = vsel %vm335, %v328, %v330
    %v339 = vsel %vm335, %v334, %v328
    %s340 = scalar_lea.vmem [#allocation6], 6
    %v341 = vld [vmem:[%s340] ss:$8 sm:$0xf]
    %v343 = vlaneseq
    %v344 = vshrl.u32 %v343, 7
    %v345 = vsub.s32 0, %v344
    %v346 = vrot.slane %v341, %v345
    %v347 = vlaneseq
    %v348 = vshrl.u32 %v347, 7
    %v349 = vsub.s32 1, %v348
    %v350 = vrot.slane %v341, %v349
    %v351 = vlaneseq
    %v352 = vshrl.u32 %v351, 7
    %v353 = vsub.s32 2, %v352
    %v354 = vrot.slane %v341, %v353
    %v355 = vlaneseq
    %v356 = vshrl.u32 %v355, 7
    %v357 = vsub.s32 3, %v356
    %v358 = vrot.slane %v341, %v357
    %v363 = vmul.f32 %v338, %v346
    %v364 = vmul.f32 %v337, %v350
    %v365 = vmul.f32 %v336, %v354
    %v366 = vmul.f32 %v339, %v358
    %367 = vst [vmem:[#allocation2 + $0xe0] sm:$0xff] %v363
    %368 = vst [vmem:[#allocation2 + $0xe8] sm:$0xff] %v364
    %369 = vst [vmem:[#allocation2 + $0xf0] sm:$0xff] %v365
    %370 = vst [vmem:[#allocation2 + $0xf8] sm:$0xff] %v366
    %371 = vrot.lane.b32.xlu0 %v52, 111
    %v372 = vpop.permute.xlu0 %371
    %373 = vrot.lane.b32.xlu0 %v53, 111
    %v374 = vpop.permute.xlu0 %373
    %375 = vrot.lane.b32.xlu0 %v54, 111
    %v376 = vpop.permute.xlu0 %375
    %377 = vrot.lane.b32.xlu0 %v55, 111
    %v378 = vpop.permute.xlu0 %377
    %vm379 = vcmp.lt.s32.totalorder %v67, 111
    %v380 = vsel %vm379, %v376, %v378
    %v381 = vsel %vm379, %v374, %v376
    %v382 = vsel %vm379, %v372, %v374
    %v383 = vsel %vm379, %v378, %v372
    %s384 = scalar_lea.vmem [#allocation6], 7
    %v385 = vld [vmem:[%s384] ss:$8 sm:$0xf]
    %v387 = vlaneseq
    %v388 = vshrl.u32 %v387, 7
    %v389 = vsub.s32 0, %v388
    %v390 = vrot.slane %v385, %v389
    %v391 = vlaneseq
    %v392 = vshrl.u32 %v391, 7
    %v393 = vsub.s32 1, %v392
    %v394 = vrot.slane %v385, %v393
    %v395 = vlaneseq
    %v396 = vshrl.u32 %v395, 7
    %v397 = vsub.s32 2, %v396
    %v398 = vrot.slane %v385, %v397
    %v399 = vlaneseq
    %v400 = vshrl.u32 %v399, 7
    %v401 = vsub.s32 3, %v400
    %v402 = vrot.slane %v385, %v401
    %v407 = vmul.f32 %v382, %v390
    %v408 = vmul.f32 %v381, %v394
    %v409 = vmul.f32 %v380, %v398
    %v410 = vmul.f32 %v383, %v402
    %411 = vst [vmem:[#allocation2 + $0x100] sm:$0xff] %v407
    %412 = vst [vmem:[#allocation2 + $0x108] sm:$0xff] %v408
    %413 = vst [vmem:[#allocation2 + $0x110] sm:$0xff] %v409
    %414 = vst [vmem:[#allocation2 + $0x118] sm:$0xff] %v410
    %v415 = vld [vmem:[#allocation2] sm:$0xff]
    %v416 = vld [vmem:[#allocation2 + $0x8] sm:$0xff]
    %v417 = vld [vmem:[#allocation2 + $0x10] sm:$0xff]
    %v418 = vld [vmem:[#allocation2 + $0x18] sm:$0xff]
    %v419 = vld [vmem:[#allocation2 + $0x20] sm:$0xff]
    %v420 = vld [vmem:[#allocation2 + $0x28] sm:$0xff]
    %v421 = vld [vmem:[#allocation2 + $0x30] sm:$0xff]
    %v422 = vld [vmem:[#allocation2 + $0x38] sm:$0xff]
    %v423 = vld [vmem:[#allocation2 + $0x40] sm:$0xff]
    %v424 = vld [vmem:[#allocation2 + $0x48] sm:$0xff]
    %v425 = vld [vmem:[#allocation2 + $0x50] sm:$0xff]
    %v426 = vld [vmem:[#allocation2 + $0x58] sm:$0xff]
    %v427 = vld [vmem:[#allocation2 + $0x60] sm:$0xff]
    %v428 = vld [vmem:[#allocation2 + $0x68] sm:$0xff]
    %v429 = vld [vmem:[#allocation2 + $0x70] sm:$0xff]
    %v430 = vld [vmem:[#allocation2 + $0x78] sm:$0xff]
    %v431 = vld [vmem:[#allocation2 + $0x80] sm:$0xff]
    %v432 = vld [vmem:[#allocation2 + $0x88] sm:$0xff]
    %v433 = vld [vmem:[#allocation2 + $0x90] sm:$0xff]
    %v434 = vld [vmem:[#allocation2 + $0x98] sm:$0xff]
    %v435 = vld [vmem:[#allocation2 + $0xa0] sm:$0xff]
    %v436 = vld [vmem:[#allocation2 + $0xa8] sm:$0xff]
    %v437 = vld [vmem:[#allocation2 + $0xb0] sm:$0xff]
    %v438 = vld [vmem:[#allocation2 + $0xb8] sm:$0xff]
    %v439 = vld [vmem:[#allocation2 + $0xc0] sm:$0xff]
    %v440 = vld [vmem:[#allocation2 + $0xc8] sm:$0xff]
    %v441 = vld [vmem:[#allocation2 + $0xd0] sm:$0xff]
    %v442 = vld [vmem:[#allocation2 + $0xd8] sm:$0xff]
    %v443 = vld [vmem:[#allocation2 + $0xe0] sm:$0xff]
    %v444 = vld [vmem:[#allocation2 + $0xe8] sm:$0xff]
    %v445 = vld [vmem:[#allocation2 + $0xf0] sm:$0xff]
    %v446 = vld [vmem:[#allocation2 + $0xf8] sm:$0xff]
    %v447 = vld [vmem:[#allocation2 + $0x100] sm:$0xff]
    %v448 = vld [vmem:[#allocation2 + $0x108] sm:$0xff]
    %v449 = vld [vmem:[#allocation2 + $0x110] sm:$0xff]
    %v450 = vld [vmem:[#allocation2 + $0x118] sm:$0xff]
    %452 = vset.pattern.permute.xlu0 0
    %453 = vperm.xlu0 %452, %v57
    %v454 = vpop.permute.xlu0 %453
    %vm456 = vcmask 588800
    %v458 = vsel %vm456, %v56, 0
    %460 = vmatprep.subr.mxu0 %v416
    %461 = vmatpush1.msra.mxu0 %v415
    %462 = vmatprep.subr.mxu0 %v420
    %463 = vmatpush1.msra.mxu0 %v419
    %464 = vmatprep.subr.mxu0 %v424
    %465 = vmatpush1.msra.mxu0 %v423
    %466 = vmatprep.subr.mxu0 %v428
    %467 = vmatpush1.msra.mxu0 %v427
    %468 = vmatprep.subr.mxu0 %v432
    %469 = vmatpush1.msra.mxu0 %v431
    %470 = vmatprep.subr.mxu0 %v436
    %471 = vmatpush1.msra.mxu0 %v435
    %472 = vmatprep.subr.mxu0 %v440
    %473 = vmatpush1.msra.mxu0 %v439
    %474 = vmatprep.subr.mxu0 %v444
    %475 = vmatpush1.msra.mxu0 %v443
    %476 = vmatprep.subr.mxu0 %v448
    %477 = vmatpush1.msra.mxu0 %v447
    %478 = vmatprep.subr.mxu0 0.0
    %479 = vmatpush1.msra.mxu0 0.0
    %480 = vmatprep.subr.mxu0 0.0
    %481 = vmatpush1.msra.mxu0 0.0
    %482 = vmatprep.subr.mxu0 0.0
    %483 = vmatpush1.msra.mxu0 0.0
    %484 = vmatprep.subr.mxu0 0.0
    %485 = vmatpush1.msra.mxu0 0.0
    %486 = vmatprep.subr.mxu0 0.0
    %487 = vmatpush1.msra.mxu0 0.0
    %488 = vmatprep.subr.mxu0 0.0
    %489 = vmatpush1.msra.mxu0 0.0
    %490 = vmatprep.subr.mxu0 0.0
    %491 = vmatpush1.msra.mxu0 0.0
    %492 = vmatprep.subr.mxu0 0.0
    %493 = vmatpush1.msra.mxu0 0.0
    %494 = vmatprep.subr.mxu0 0.0
    %495 = vmatpush1.msra.mxu0 0.0
    %496 = vmatprep.subr.mxu0 0.0
    %497 = vmatpush1.msra.mxu0 0.0
    %498 = vmatprep.subr.mxu0 0.0
    %499 = vmatpush1.msra.mxu0 0.0
    %500 = vmatprep.subr.mxu0 0.0
    %501 = vmatpush1.msra.mxu0 0.0
    %502 = vmatprep.subr.mxu0 0.0
    %503 = vmatpush1.msra.mxu0 0.0
    %504 = vmatprep.subr.mxu0 0.0
    %505 = vmatpush1.msra.mxu0 0.0
    %506 = vmatprep.subr.mxu0 0.0
    %507 = vmatpush1.msra.mxu0 0.0
    %508 = vmatprep.subr.mxu0 0.0
    %509 = vmatpush1.msra.mxu0 0.0
    %510 = vmatprep.subr.mxu0 0.0
    %511 = vmatpush1.msra.mxu0 0.0
    %512 = vmatprep.subr.mxu0 0.0
    %513 = vmatpush1.msra.mxu0 0.0
    %514 = vmatprep.subr.mxu0 0.0
    %515 = vmatpush1.msra.mxu0 0.0
    %516 = vmatprep.subr.mxu0 0.0
    %517 = vmatpush1.msra.mxu0 0.0
    %518 = vmatprep.subr.mxu0 0.0
    %519 = vmatpush1.msra.mxu0 0.0
    %520 = vmatprep.subr.mxu0 0.0
    %521 = vmatpush1.msra.mxu0 0.0
    %522 = vmatprep.subr.mxu0 0.0
    %523 = vmatpush1.msra.mxu0 0.0
    %524 = vmatprep.mubr.f32.mxu0 0.0
    %525 = vmatmul.mubr.f32.gmra.mrb[0].mxu0 %v458
    %v526 = vpop.f32.mrb[0].mxu0
    %v527 = vadd.f32 %v454, %v526
    %v528 = vpop.f32.mrb[0].mxu0
    %v529 = vadd.f32 %v454, %v528
    %530 = vdwg.mxu0
    %531 = vmatprep.subr.mxu0 %v418
    %532 = vmatpush1.msra.mxu0 %v417
    %533 = vmatprep.subr.mxu0 %v422
    %534 = vmatpush1.msra.mxu0 %v421
    %535 = vmatprep.subr.mxu0 %v426
    %536 = vmatpush1.msra.mxu0 %v425
    %537 = vmatprep.subr.mxu0 %v430
    %538 = vmatpush1.msra.mxu0 %v429
    %539 = vmatprep.subr.mxu0 %v434
    %540 = vmatpush1.msra.mxu0 %v433
    %541 = vmatprep.subr.mxu0 %v438
    %542 = vmatpush1.msra.mxu0 %v437
    %543 = vmatprep.subr.mxu0 %v442
    %544 = vmatpush1.msra.mxu0 %v441
    %545 = vmatprep.subr.mxu0 %v446
    %546 = vmatpush1.msra.mxu0 %v445
    %547 = vmatprep.subr.mxu0 %v450
    %548 = vmatpush1.msra.mxu0 %v449
    %549 = vmatprep.subr.mxu0 0.0
    %550 = vmatpush1.msra.mxu0 0.0
    %551 = vmatprep.subr.mxu0 0.0
    %552 = vmatpush1.msra.mxu0 0.0
    %553 = vmatprep.subr.mxu0 0.0
    %554 = vmatpush1.msra.mxu0 0.0
    %555 = vmatprep.subr.mxu0 0.0
    %556 = vmatpush1.msra.mxu0 0.0
    %557 = vmatprep.subr.mxu0 0.0
    %558 = vmatpush1.msra.mxu0 0.0
    %559 = vmatprep.subr.mxu0 0.0
    %560 = vmatpush1.msra.mxu0 0.0
    %561 = vmatprep.subr.mxu0 0.0
    %562 = vmatpush1.msra.mxu0 0.0
    %563 = vmatprep.subr.mxu0 0.0
    %564 = vmatpush1.msra.mxu0 0.0
    %565 = vmatprep.subr.mxu0 0.0
    %566 = vmatpush1.msra.mxu0 0.0
    %567 = vmatprep.subr.mxu0 0.0
    %568 = vmatpush1.msra.mxu0 0.0
    %569 = vmatprep.subr.mxu0 0.0
    %570 = vmatpush1.msra.mxu0 0.0
    %571 = vmatprep.subr.mxu0 0.0
    %572 = vmatpush1.msra.mxu0 0.0
    %573 = vmatprep.subr.mxu0 0.0
    %574 = vmatpush1.msra.mxu0 0.0
    %575 = vmatprep.subr.mxu0 0.0
    %576 = vmatpush1.msra.mxu0 0.0
    %577 = vmatprep.subr.mxu0 0.0
    %578 = vmatpush1.msra.mxu0 0.0
    %579 = vmatprep.subr.mxu0 0.0
    %580 = vmatpush1.msra.mxu0 0.0
    %581 = vmatprep.subr.mxu0 0.0
    %582 = vmatpush1.msra.mxu0 0.0
    %583 = vmatprep.subr.mxu0 0.0
    %584 = vmatpush1.msra.mxu0 0.0
    %585 = vmatprep.subr.mxu0 0.0
    %586 = vmatpush1.msra.mxu0 0.0
    %587 = vmatprep.subr.mxu0 0.0
    %588 = vmatpush1.msra.mxu0 0.0
    %589 = vmatprep.subr.mxu0 0.0
    %590 = vmatpush1.msra.mxu0 0.0
    %591 = vmatprep.subr.mxu0 0.0
    %592 = vmatpush1.msra.mxu0 0.0
    %593 = vmatprep.subr.mxu0 0.0
    %594 = vmatpush1.msra.mxu0 0.0
    %595 = vmatprep.mubr.f32.mxu0 0.0
    %596 = vmatmul.mubr.f32.gmra.mrb[0].mxu0 %v458
    %v597 = vpop.f32.mrb[0].mxu0
    %v598 = vadd.f32 %v454, %v597
    %v599 = vpop.f32.mrb[0].mxu0
    %v600 = vadd.f32 %v454, %v599
    %601 = vdwg.mxu0
    %v602 = vmax.f32 %v527, 0.0
    %v603 = vmax.f32 %v529, 0.0
    %v604 = vmax.f32 %v598, 0.0
    %v605 = vmax.f32 %v600, 0.0
    %v606 = vld [vmem:[%s4] sm:$0xff]
    %v607 = vld [vmem:[%s5] sm:$0xff]
    %608 = vrot.lane.b32.xlu0 %v602, 17
    %v609 = vpop.permute.xlu0 %608
    %610 = vrot.lane.b32.xlu0 %v603, 17
    %v611 = vpop.permute.xlu0 %610
    %612 = vrot.lane.b32.xlu0 %v604, 17
    %v613 = vpop.permute.xlu0 %612
    %614 = vrot.lane.b32.xlu0 %v605, 17
    %v615 = vpop.permute.xlu0 %614
    %v616 = vsel %vm68, %v613, %v615
    %v617 = vsel %vm68, %v611, %v613
    %v618 = vsel %vm68, %v609, %v611
    %v619 = vsel %vm68, %v615, %v609
    %v620 = vld [vmem:[#allocation6] ss:$8 sm:$0xf]
    %v622 = vlaneseq
    %v623 = vshrl.u32 %v622, 7
    %v624 = vsub.s32 0, %v623
    %v625 = vrot.slane %v620, %v624
    %v626 = vlaneseq
    %v627 = vshrl.u32 %v626, 7
    %v628 = vsub.s32 1, %v627
    %v629 = vrot.slane %v620, %v628
    %v630 = vlaneseq
    %v631 = vshrl.u32 %v630, 7
    %v632 = vsub.s32 2, %v631
    %v633 = vrot.slane %v620, %v632
    %v634 = vlaneseq
    %v635 = vshrl.u32 %v634, 7
    %v636 = vsub.s32 3, %v635
    %v637 = vrot.slane %v620, %v636
    %v642 = vmul.f32 %v619, %v625
    %v643 = vmul.f32 %v618, %v629
    %v644 = vmul.f32 %v617, %v633
    %v645 = vmul.f32 %v616, %v637
    %646 = vst [vmem:[#allocation2] sm:$0xff] %v642
    %647 = vst [vmem:[#allocation2 + $0x8] sm:$0xff] %v643
    %648 = vst [vmem:[#allocation2 + $0x10] sm:$0xff] %v644
    %649 = vst [vmem:[#allocation2 + $0x18] sm:$0xff] %v645
    %650 = vrot.lane.b32.xlu0 %v602, 16
    %v651 = vpop.permute.xlu0 %650
    %652 = vrot.lane.b32.xlu0 %v603, 16
    %v653 = vpop.permute.xlu0 %652
    %654 = vrot.lane.b32.xlu0 %v604, 16
    %v655 = vpop.permute.xlu0 %654
    %656 = vrot.lane.b32.xlu0 %v605, 16
    %v657 = vpop.permute.xlu0 %656
    %v658 = vsel %vm111, %v655, %v657
    %v659 = vsel %vm111, %v653, %v655
    %v660 = vsel %vm111, %v651, %v653
    %v661 = vsel %vm111, %v657, %v651
    %v662 = vld [vmem:[%s116] ss:$8 sm:$0xf]
    %v664 = vlaneseq
    %v665 = vshrl.u32 %v664, 7
    %v666 = vsub.s32 0, %v665
    %v667 = vrot.slane %v662, %v666
    %v668 = vlaneseq
    %v669 = vshrl.u32 %v668, 7
    %v670 = vsub.s32 1, %v669
    %v671 = vrot.slane %v662, %v670
    %v672 = vlaneseq
    %v673 = vshrl.u32 %v672, 7
    %v674 = vsub.s32 2, %v673
    %v675 = vrot.slane %v662, %v674
    %v676 = vlaneseq
    %v677 = vshrl.u32 %v676, 7
    %v678 = vsub.s32 3, %v677
    %v679 = vrot.slane %v662, %v678
    %v684 = vmul.f32 %v661, %v667
    %v685 = vmul.f32 %v660, %v671
    %v686 = vmul.f32 %v659, %v675
    %v687 = vmul.f32 %v658, %v679
    %688 = vst [vmem:[#allocation2 + $0x20] sm:$0xff] %v684
    %689 = vst [vmem:[#allocation2 + $0x28] sm:$0xff] %v685
    %690 = vst [vmem:[#allocation2 + $0x30] sm:$0xff] %v686
    %691 = vst [vmem:[#allocation2 + $0x38] sm:$0xff] %v687
    %692 = vrot.lane.b32.xlu0 %v602, 15
    %v693 = vpop.permute.xlu0 %692
    %694 = vrot.lane.b32.xlu0 %v603, 15
    %v695 = vpop.permute.xlu0 %694
    %696 = vrot.lane.b32.xlu0 %v604, 15
    %v697 = vpop.permute.xlu0 %696
    %698 = vrot.lane.b32.xlu0 %v605, 15
    %v699 = vpop.permute.xlu0 %698
    %v700 = vsel %vm155, %v697, %v699
    %v701 = vsel %vm155, %v695, %v697
    %v702 = vsel %vm155, %v693, %v695
    %v703 = vsel %vm155, %v699, %v693
    %v704 = vld [vmem:[%s160] ss:$8 sm:$0xf]
    %v706 = vlaneseq
    %v707 = vshrl.u32 %v706, 7
    %v708 = vsub.s32 0, %v707
    %v709 = vrot.slane %v704, %v708
    %v710 = vlaneseq
    %v711 = vshrl.u32 %v710, 7
    %v712 = vsub.s32 1, %v711
    %v713 = vrot.slane %v704, %v712
    %v714 = vlaneseq
    %v715 = vshrl.u32 %v714, 7
    %v716 = vsub.s32 2, %v715
    %v717 = vrot.slane %v704, %v716
    %v718 = vlaneseq
    %v719 = vshrl.u32 %v718, 7
    %v720 = vsub.s32 3, %v719
    %v721 = vrot.slane %v704, %v720
    %v726 = vmul.f32 %v703, %v709
    %v727 = vmul.f32 %v702, %v713
    %v728 = vmul.f32 %v701, %v717
    %v729 = vmul.f32 %v700, %v721
    %730 = vst [vmem:[#allocation2 + $0x40] sm:$0xff] %v726
    %731 = vst [vmem:[#allocation2 + $0x48] sm:$0xff] %v727
    %732 = vst [vmem:[#allocation2 + $0x50] sm:$0xff] %v728
    %733 = vst [vmem:[#allocation2 + $0x58] sm:$0xff] %v729
    %734 = vrot.lane.b32.xlu0 %v602, 1
    %v735 = vpop.permute.xlu0 %734
    %736 = vrot.lane.b32.xlu0 %v603, 1
    %v737 = vpop.permute.xlu0 %736
    %738 = vrot.lane.b32.xlu0 %v604, 1
    %v739 = vpop.permute.xlu0 %738
    %740 = vrot.lane.b32.xlu0 %v605, 1
    %v741 = vpop.permute.xlu0 %740
    %v742 = vsel %vm199, %v739, %v741
    %v743 = vsel %vm199, %v737, %v739
    %v744 = vsel %vm199, %v735, %v737
    %v745 = vsel %vm199, %v741, %v735
    %v746 = vld [vmem:[%s204] ss:$8 sm:$0xf]
    %v748 = vlaneseq
    %v749 = vshrl.u32 %v748, 7
    %v750 = vsub.s32 0, %v749
    %v751 = vrot.slane %v746, %v750
    %v752 = vlaneseq
    %v753 = vshrl.u32 %v752, 7
    %v754 = vsub.s32 1, %v753
    %v755 = vrot.slane %v746, %v754
    %v756 = vlaneseq
    %v757 = vshrl.u32 %v756, 7
    %v758 = vsub.s32 2, %v757
    %v759 = vrot.slane %v746, %v758
    %v760 = vlaneseq
    %v761 = vshrl.u32 %v760, 7
    %v762 = vsub.s32 3, %v761
    %v763 = vrot.slane %v746, %v762
    %v768 = vmul.f32 %v745, %v751
    %v769 = vmul.f32 %v744, %v755
    %v770 = vmul.f32 %v743, %v759
    %v771 = vmul.f32 %v742, %v763
    %772 = vst [vmem:[#allocation2 + $0x60] sm:$0xff] %v768
    %773 = vst [vmem:[#allocation2 + $0x68] sm:$0xff] %v769
    %774 = vst [vmem:[#allocation2 + $0x70] sm:$0xff] %v770
    %775 = vst [vmem:[#allocation2 + $0x78] sm:$0xff] %v771
    %776 = vst [vmem:[#allocation2 + $0x80] sm:$0xff] %v602
    %777 = vst [vmem:[#allocation2 + $0x88] sm:$0xff] %v603
    %778 = vst [vmem:[#allocation2 + $0x90] sm:$0xff] %v604
    %779 = vst [vmem:[#allocation2 + $0x98] sm:$0xff] %v605
    %780 = vrot.lane.b32.xlu0 %v602, 127
    %v781 = vpop.permute.xlu0 %780
    %782 = vrot.lane.b32.xlu0 %v603, 127
    %v783 = vpop.permute.xlu0 %782
    %784 = vrot.lane.b32.xlu0 %v604, 127
    %v785 = vpop.permute.xlu0 %784
    %786 = vrot.lane.b32.xlu0 %v605, 127
    %v787 = vpop.permute.xlu0 %786
    %v788 = vsel %vm247, %v785, %v787
    %v789 = vsel %vm247, %v783, %v785
    %v790 = vsel %vm247, %v781, %v783
    %v791 = vsel %vm247, %v787, %v781
    %v792 = vld [vmem:[%s252] ss:$8 sm:$0xf]
    %v794 = vlaneseq
    %v795 = vshrl.u32 %v794, 7
    %v796 = vsub.s32 0, %v795
    %v797 = vrot.slane %v792, %v796
    %v798 = vlaneseq
    %v799 = vshrl.u32 %v798, 7
    %v800 = vsub.s32 1, %v799
    %v801 = vrot.slane %v792, %v800
    %v802 = vlaneseq
    %v803 = vshrl.u32 %v802, 7
    %v804 = vsub.s32 2, %v803
    %v805 = vrot.slane %v792, %v804
    %v806 = vlaneseq
    %v807 = vshrl.u32 %v806, 7
    %v808 = vsub.s32 3, %v807
    %v809 = vrot.slane %v792, %v808
    %v814 = vmul.f32 %v790, %v797
    %v815 = vmul.f32 %v789, %v801
    %v816 = vmul.f32 %v788, %v805
    %v817 = vmul.f32 %v791, %v809
    %818 = vst [vmem:[#allocation2 + $0xa0] sm:$0xff] %v814
    %819 = vst [vmem:[#allocation2 + $0xa8] sm:$0xff] %v815
    %820 = vst [vmem:[#allocation2 + $0xb0] sm:$0xff] %v816
    %821 = vst [vmem:[#allocation2 + $0xb8] sm:$0xff] %v817
    %822 = vrot.lane.b32.xlu0 %v602, 113
    %v823 = vpop.permute.xlu0 %822
    %824 = vrot.lane.b32.xlu0 %v603, 113
    %v825 = vpop.permute.xlu0 %824
    %826 = vrot.lane.b32.xlu0 %v604, 113
    %v827 = vpop.permute.xlu0 %826
    %828 = vrot.lane.b32.xlu0 %v605, 113
    %v829 = vpop.permute.xlu0 %828
    %v830 = vsel %vm291, %v827, %v829
    %v831 = vsel %vm291, %v825, %v827
    %v832 = vsel %vm291, %v823, %v825
    %v833 = vsel %vm291, %v829, %v823
    %v834 = vld [vmem:[%s296] ss:$8 sm:$0xf]
    %v836 = vlaneseq
    %v837 = vshrl.u32 %v836, 7
    %v838 = vsub.s32 0, %v837
    %v839 = vrot.slane %v834, %v838
    %v840 = vlaneseq
    %v841 = vshrl.u32 %v840, 7
    %v842 = vsub.s32 1, %v841
    %v843 = vrot.slane %v834, %v842
    %v844 = vlaneseq
    %v845 = vshrl.u32 %v844, 7
    %v846 = vsub.s32 2, %v845
    %v847 = vrot.slane %v834, %v846
    %v848 = vlaneseq
    %v849 = vshrl.u32 %v848, 7
    %v850 = vsub.s32 3, %v849
    %v851 = vrot.slane %v834, %v850
    %v856 = vmul.f32 %v832, %v839
    %v857 = vmul.f32 %v831, %v843
    %v858 = vmul.f32 %v830, %v847
    %v859 = vmul.f32 %v833, %v851
    %860 = vst [vmem:[#allocation2 + $0xc0] sm:$0xff] %v856
    %861 = vst [vmem:[#allocation2 + $0xc8] sm:$0xff] %v857
    %862 = vst [vmem:[#allocation2 + $0xd0] sm:$0xff] %v858
    %863 = vst [vmem:[#allocation2 + $0xd8] sm:$0xff] %v859
    %864 = vrot.lane.b32.xlu0 %v602, 112
    %v865 = vpop.permute.xlu0 %864
    %866 = vrot.lane.b32.xlu0 %v603, 112
    %v867 = vpop.permute.xlu0 %866
    %868 = vrot.lane.b32.xlu0 %v604, 112
    %v869 = vpop.permute.xlu0 %868
    %870 = vrot.lane.b32.xlu0 %v605, 112
    %v871 = vpop.permute.xlu0 %870
    %v872 = vsel %vm335, %v869, %v871
    %v873 = vsel %vm335, %v867, %v869
    %v874 = vsel %vm335, %v865, %v867
    %v875 = vsel %vm335, %v871, %v865
    %v876 = vld [vmem:[%s340] ss:$8 sm:$0xf]
    %v878 = vlaneseq
    %v879 = vshrl.u32 %v878, 7
    %v880 = vsub.s32 0, %v879
    %v881 = vrot.slane %v876, %v880
    %v882 = vlaneseq
    %v883 = vshrl.u32 %v882, 7
    %v884 = vsub.s32 1, %v883
    %v885 = vrot.slane %v876, %v884
    %v886 = vlaneseq
    %v887 = vshrl.u32 %v886, 7
    %v888 = vsub.s32 2, %v887
    %v889 = vrot.slane %v876, %v888
    %v890 = vlaneseq
    %v891 = vshrl.u32 %v890, 7
    %v892 = vsub.s32 3, %v891
    %v893 = vrot.slane %v876, %v892
    %v898 = vmul.f32 %v874, %v881
    %v899 = vmul.f32 %v873, %v885
    %v900 = vmul.f32 %v872, %v889
    %v901 = vmul.f32 %v875, %v893
    %902 = vst [vmem:[#allocation2 + $0xe0] sm:$0xff] %v898
    %903 = vst [vmem:[#allocation2 + $0xe8] sm:$0xff] %v899
    %904 = vst [vmem:[#allocation2 + $0xf0] sm:$0xff] %v900
    %905 = vst [vmem:[#allocation2 + $0xf8] sm:$0xff] %v901
    %906 = vrot.lane.b32.xlu0 %v602, 111
    %v907 = vpop.permute.xlu0 %906
    %908 = vrot.lane.b32.xlu0 %v603, 111
    %v909 = vpop.permute.xlu0 %908
    %910 = vrot.lane.b32.xlu0 %v604, 111
    %v911 = vpop.permute.xlu0 %910
    %912 = vrot.lane.b32.xlu0 %v605, 111
    %v913 = vpop.permute.xlu0 %912
    %v914 = vsel %vm379, %v911, %v913
    %v915 = vsel %vm379, %v909, %v911
    %v916 = vsel %vm379, %v907, %v909
    %v917 = vsel %vm379, %v913, %v907
    %v918 = vld [vmem:[%s384] ss:$8 sm:$0xf]
    %v920 = vlaneseq
    %v921 = vshrl.u32 %v920, 7
    %v922 = vsub.s32 0, %v921
    %v923 = vrot.slane %v918, %v922
    %v924 = vlaneseq
    %v925 = vshrl.u32 %v924, 7
    %v926 = vsub.s32 1, %v925
    %v927 = vrot.slane %v918, %v926
    %v928 = vlaneseq
    %v929 = vshrl.u32 %v928, 7
    %v930 = vsub.s32 2, %v929
    %v931 = vrot.slane %v918, %v930
    %v932 = vlaneseq
    %v933 = vshrl.u32 %v932, 7
    %v934 = vsub.s32 3, %v933
    %v935 = vrot.slane %v918, %v934
    %v940 = vmul.f32 %v916, %v923
    %v941 = vmul.f32 %v915, %v927
    %v942 = vmul.f32 %v914, %v931
    %v943 = vmul.f32 %v917, %v935
    %944 = vst [vmem:[#allocation2 + $0x100] sm:$0xff] %v940
    %945 = vst [vmem:[#allocation2 + $0x108] sm:$0xff] %v941
    %946 = vst [vmem:[#allocation2 + $0x110] sm:$0xff] %v942
    %947 = vst [vmem:[#allocation2 + $0x118] sm:$0xff] %v943
    %v948 = vld [vmem:[#allocation2] sm:$0xff]
    %v949 = vld [vmem:[#allocation2 + $0x8] sm:$0xff]
    %v950 = vld [vmem:[#allocation2 + $0x10] sm:$0xff]
    %v951 = vld [vmem:[#allocation2 + $0x18] sm:$0xff]
    %v952 = vld [vmem:[#allocation2 + $0x20] sm:$0xff]
    %v953 = vld [vmem:[#allocation2 + $0x28] sm:$0xff]
    %v954 = vld [vmem:[#allocation2 + $0x30] sm:$0xff]
    %v955 = vld [vmem:[#allocation2 + $0x38] sm:$0xff]
    %v956 = vld [vmem:[#allocation2 + $0x40] sm:$0xff]
    %v957 = vld [vmem:[#allocation2 + $0x48] sm:$0xff]
    %v958 = vld [vmem:[#allocation2 + $0x50] sm:$0xff]
    %v959 = vld [vmem:[#allocation2 + $0x58] sm:$0xff]
    %v960 = vld [vmem:[#allocation2 + $0x60] sm:$0xff]
    %v961 = vld [vmem:[#allocation2 + $0x68] sm:$0xff]
    %v962 = vld [vmem:[#allocation2 + $0x70] sm:$0xff]
    %v963 = vld [vmem:[#allocation2 + $0x78] sm:$0xff]
    %v964 = vld [vmem:[#allocation2 + $0x80] sm:$0xff]
    %v965 = vld [vmem:[#allocation2 + $0x88] sm:$0xff]
    %v966 = vld [vmem:[#allocation2 + $0x90] sm:$0xff]
    %v967 = vld [vmem:[#allocation2 + $0x98] sm:$0xff]
    %v968 = vld [vmem:[#allocation2 + $0xa0] sm:$0xff]
    %v969 = vld [vmem:[#allocation2 + $0xa8] sm:$0xff]
    %v970 = vld [vmem:[#allocation2 + $0xb0] sm:$0xff]
    %v971 = vld [vmem:[#allocation2 + $0xb8] sm:$0xff]
    %v972 = vld [vmem:[#allocation2 + $0xc0] sm:$0xff]
    %v973 = vld [vmem:[#allocation2 + $0xc8] sm:$0xff]
    %v974 = vld [vmem:[#allocation2 + $0xd0] sm:$0xff]
    %v975 = vld [vmem:[#allocation2 + $0xd8] sm:$0xff]
    %v976 = vld [vmem:[#allocation2 + $0xe0] sm:$0xff]
    %v977 = vld [vmem:[#allocation2 + $0xe8] sm:$0xff]
    %v978 = vld [vmem:[#allocation2 + $0xf0] sm:$0xff]
    %v979 = vld [vmem:[#allocation2 + $0xf8] sm:$0xff]
    %v980 = vld [vmem:[#allocation2 + $0x100] sm:$0xff]
    %v981 = vld [vmem:[#allocation2 + $0x108] sm:$0xff]
    %v982 = vld [vmem:[#allocation2 + $0x110] sm:$0xff]
    %v983 = vld [vmem:[#allocation2 + $0x118] sm:$0xff]
    %985 = vset.pattern.permute.xlu0 0
    %986 = vperm.xlu0 %985, %v607
    %v987 = vpop.permute.xlu0 %986
    %v990 = vsel %vm456, %v606, 0
    %992 = vmatprep.subr.mxu0 %v949
    %993 = vmatpush1.msra.mxu0 %v948
    %994 = vmatprep.subr.mxu0 %v953
    %995 = vmatpush1.msra.mxu0 %v952
    %996 = vmatprep.subr.mxu0 %v957
    %997 = vmatpush1.msra.mxu0 %v956
    %998 = vmatprep.subr.mxu0 %v961
    %999 = vmatpush1.msra.mxu0 %v960
    %1000 = vmatprep.subr.mxu0 %v965
    %1001 = vmatpush1.msra.mxu0 %v964
    %1002 = vmatprep.subr.mxu0 %v969
    %1003 = vmatpush1.msra.mxu0 %v968
    %1004 = vmatprep.subr.mxu0 %v973
    %1005 = vmatpush1.msra.mxu0 %v972
    %1006 = vmatprep.subr.mxu0 %v977
    %1007 = vmatpush1.msra.mxu0 %v976
    %1008 = vmatprep.subr.mxu0 %v981
    %1009 = vmatpush1.msra.mxu0 %v980
    %1010 = vmatprep.subr.mxu0 0.0
    %1011 = vmatpush1.msra.mxu0 0.0
    %1012 = vmatprep.subr.mxu0 0.0
    %1013 = vmatpush1.msra.mxu0 0.0
    %1014 = vmatprep.subr.mxu0 0.0
    %1015 = vmatpush1.msra.mxu0 0.0
    %1016 = vmatprep.subr.mxu0 0.0
    %1017 = vmatpush1.msra.mxu0 0.0
    %1018 = vmatprep.subr.mxu0 0.0
    %1019 = vmatpush1.msra.mxu0 0.0
    %1020 = vmatprep.subr.mxu0 0.0
    %1021 = vmatpush1.msra.mxu0 0.0
    %1022 = vmatprep.subr.mxu0 0.0
    %1023 = vmatpush1.msra.mxu0 0.0
    %1024 = vmatprep.subr.mxu0 0.0
    %1025 = vmatpush1.msra.mxu0 0.0
    %1026 = vmatprep.subr.mxu0 0.0
    %1027 = vmatpush1.msra.mxu0 0.0
    %1028 = vmatprep.subr.mxu0 0.0
    %1029 = vmatpush1.msra.mxu0 0.0
    %1030 = vmatprep.subr.mxu0 0.0
    %1031 = vmatpush1.msra.mxu0 0.0
    %1032 = vmatprep.subr.mxu0 0.0
    %1033 = vmatpush1.msra.mxu0 0.0
    %1034 = vmatprep.subr.mxu0 0.0
    %1035 = vmatpush1.msra.mxu0 0.0
    %1036 = vmatprep.subr.mxu0 0.0
    %1037 = vmatpush1.msra.mxu0 0.0
    %1038 = vmatprep.subr.mxu0 0.0
    %1039 = vmatpush1.msra.mxu0 0.0
    %1040 = vmatprep.subr.mxu0 0.0
    %1041 = vmatpush1.msra.mxu0 0.0
    %1042 = vmatprep.subr.mxu0 0.0
    %1043 = vmatpush1.msra.mxu0 0.0
    %1044 = vmatprep.subr.mxu0 0.0
    %1045 = vmatpush1.msra.mxu0 0.0
    %1046 = vmatprep.subr.mxu0 0.0
    %1047 = vmatpush1.msra.mxu0 0.0
    %1048 = vmatprep.subr.mxu0 0.0
    %1049 = vmatpush1.msra.mxu0 0.0
    %1050 = vmatprep.subr.mxu0 0.0
    %1051 = vmatpush1.msra.mxu0 0.0
    %1052 = vmatprep.subr.mxu0 0.0
    %1053 = vmatpush1.msra.mxu0 0.0
    %1054 = vmatprep.subr.mxu0 0.0
    %1055 = vmatpush1.msra.mxu0 0.0
    %1056 = vmatprep.mubr.f32.mxu0 0.0
    %1057 = vmatmul.mubr.f32.gmra.mrb[0].mxu0 %v990
    %v1058 = vpop.f32.mrb[0].mxu0
    %v1059 = vadd.f32 %v987, %v1058
    %v1060 = vpop.f32.mrb[0].mxu0
    %v1061 = vadd.f32 %v987, %v1060
    %1062 = vdwg.mxu0
    %1063 = vmatprep.subr.mxu0 %v951
    %1064 = vmatpush1.msra.mxu0 %v950
    %1065 = vmatprep.subr.mxu0 %v955
    %1066 = vmatpush1.msra.mxu0 %v954
    %1067 = vmatprep.subr.mxu0 %v959
    %1068 = vmatpush1.msra.mxu0 %v958
    %1069 = vmatprep.subr.mxu0 %v963
    %1070 = vmatpush1.msra.mxu0 %v962
    %1071 = vmatprep.subr.mxu0 %v967
    %1072 = vmatpush1.msra.mxu0 %v966
    %1073 = vmatprep.subr.mxu0 %v971
    %1074 = vmatpush1.msra.mxu0 %v970
    %1075 = vmatprep.subr.mxu0 %v975
    %1076 = vmatpush1.msra.mxu0 %v974
    %1077 = vmatprep.subr.mxu0 %v979
    %1078 = vmatpush1.msra.mxu0 %v978
    %1079 = vmatprep.subr.mxu0 %v983
    %1080 = vmatpush1.msra.mxu0 %v982
    %1081 = vmatprep.subr.mxu0 0.0
    %1082 = vmatpush1.msra.mxu0 0.0
    %1083 = vmatprep.subr.mxu0 0.0
    %1084 = vmatpush1.msra.mxu0 0.0
    %1085 = vmatprep.subr.mxu0 0.0
    %1086 = vmatpush1.msra.mxu0 0.0
    %1087 = vmatprep.subr.mxu0 0.0
    %1088 = vmatpush1.msra.mxu0 0.0
    %1089 = vmatprep.subr.mxu0 0.0
    %1090 = vmatpush1.msra.mxu0 0.0
    %1091 = vmatprep.subr.mxu0 0.0
    %1092 = vmatpush1.msra.mxu0 0.0
    %1093 = vmatprep.subr.mxu0 0.0
    %1094 = vmatpush1.msra.mxu0 0.0
    %1095 = vmatprep.subr.mxu0 0.0
    %1096 = vmatpush1.msra.mxu0 0.0
    %1097 = vmatprep.subr.mxu0 0.0
    %1098 = vmatpush1.msra.mxu0 0.0
    %1099 = vmatprep.subr.mxu0 0.0
    %1100 = vmatpush1.msra.mxu0 0.0
    %1101 = vmatprep.subr.mxu0 0.0
    %1102 = vmatpush1.msra.mxu0 0.0
    %1103 = vmatprep.subr.mxu0 0.0
    %1104 = vmatpush1.msra.mxu0 0.0
    %1105 = vmatprep.subr.mxu0 0.0
    %1106 = vmatpush1.msra.mxu0 0.0
    %1107 = vmatprep.subr.mxu0 0.0
    %1108 = vmatpush1.msra.mxu0 0.0
    %1109 = vmatprep.subr.mxu0 0.0
    %1110 = vmatpush1.msra.mxu0 0.0
    %1111 = vmatprep.subr.mxu0 0.0
    %1112 = vmatpush1.msra.mxu0 0.0
    %1113 = vmatprep.subr.mxu0 0.0
    %1114 = vmatpush1.msra.mxu0 0.0
    %1115 = vmatprep.subr.mxu0 0.0
    %1116 = vmatpush1.msra.mxu0 0.0
    %1117 = vmatprep.subr.mxu0 0.0
    %1118 = vmatpush1.msra.mxu0 0.0
    %1119 = vmatprep.subr.mxu0 0.0
    %1120 = vmatpush1.msra.mxu0 0.0
    %1121 = vmatprep.subr.mxu0 0.0
    %1122 = vmatpush1.msra.mxu0 0.0
    %1123 = vmatprep.subr.mxu0 0.0
    %1124 = vmatpush1.msra.mxu0 0.0
    %1125 = vmatprep.subr.mxu0 0.0
    %1126 = vmatpush1.msra.mxu0 0.0
    %1127 = vmatprep.mubr.f32.mxu0 0.0
    %1128 = vmatmul.mubr.f32.gmra.mrb[0].mxu0 %v990
    %v1129 = vpop.f32.mrb[0].mxu0
    %v1130 = vadd.f32 %v987, %v1129
    %v1131 = vpop.f32.mrb[0].mxu0
    %v1132 = vadd.f32 %v987, %v1131
    %1133 = vdwg.mxu0
    %v1134 = vadd.f32 %v1059, %v48
    %v1135 = vadd.f32 %v1061, %v49
    %v1136 = vadd.f32 %v1130, %v50
    %v1137 = vadd.f32 %v1132, %v51
    %1138 = vst [vmem:[#allocation8] sm:$0xff] %v1134
    %1139 = vst [vmem:[#allocation8 + $0x8] sm:$0xff] %v1135
    %1140 = vst [vmem:[#allocation8 + $0x10] sm:$0xff] %v1136
    %1141 = vst [vmem:[#allocation8 + $0x18] sm:$0xff] %v1137
    // Predicated region
    $region34: #{tpu_custom_call.1} parent=1 // pred_check
      _
    $region35: #{tpu_custom_call.1} parent=1 // pred_check_branch
      %1143 = sbr.rel (0) target = $region37
    $region36: #{tpu_custom_call.1} parent=1 // pred_region
      %s1145 = ssub.s32 512, 512
      %1146 = vsyncadd [#allocation5], %s1145
      %s1148 = sshll.u32 [#allocation8], 4
      %s1149 = int_to_ptr.vmem [resolvable:$true] %s1148
      %1151 = dma.vmem_to_hbm [thread:$0]  %s1149, 512, %s6, [#allocation5]
    $region37: #{tpu_custom_call.1} parent=1 // pred_fallthru
      _
    // Predicated region
    $region38: #{tpu_custom_call.1} parent=1 // pred_check
      _
    $region39: #{tpu_custom_call.1} parent=1 // pred_check_branch
      %1153 = sbr.rel (0) target = $region41
    $region40: #{tpu_custom_call.1} parent=1 // pred_region
      %1154 = dma.done [#allocation5], 512
    $region41: #{tpu_custom_call.1} parent=1 // pred_fallthru
      _
    %1155 = vsyncpa [#allocation4], 1
    %1156 = vsyncpa [#allocation7], 1
    %1157 = vsyncpa [#allocation5], 1

</llo_original>
